<compile_context>
chip_gen: v5e
topology: v5e:2x2
jax: 0.10.0
libtpu: 0.0.40
codegen_flags: <defaults>
</compile_context>

<pallas_src>
import math

import jax
import jax.numpy as jnp
from jax.experimental import pallas as pl
from jax.experimental.pallas import tpu as pltpu


def _round_up(x, m):
    return ((x + m - 1) // m) * m


def _patch_matmul_kernel(p_ref, w_ref, b_ref, o_ref):
    # One (tm, K) x (K, tn) MXU matmul per grid step, bias broadcast-added.
    acc = jnp.dot(p_ref[...], w_ref[...], preferred_element_type=jnp.float32)
    o_ref[...] = (acc + b_ref[...]).astype(o_ref.dtype)


def downsample2d_forward(x, weight, bias, patch_size):
    """Pallas equivalent of Downsample2D.forward.

    Args:
      x:      (B, H, W, Cin) channels-last input (module boundary layout).
      weight: (Cout, Cin, P, P) PyTorch nn.Conv2d weight layout.
      bias:   (Cout,)
      patch_size: P (kernel size == stride).
    Returns:
      (B, H//P, W//P, Cout)
    """
    P = patch_size
    B, H, W, Cin = x.shape
    Cout = weight.shape[0]
    Ho, Wo = H // P, W // P
    # PyTorch strided conv silently truncates any ragged border.
    x = x[:, : Ho * P, : Wo * P, :]

    # im2col for non-overlapping PxP patches, flattened in (ph, pw, c) order.
    patches = x.reshape(B, Ho, P, Wo, P, Cin).transpose(0, 1, 3, 2, 4, 5)
    patches = patches.reshape(B * Ho * Wo, P * P * Cin)

    # Conv weight -> (P*P*Cin, Cout) with the same (ph, pw, c) flattening order.
    w2 = weight.transpose(2, 3, 1, 0).reshape(P * P * Cin, Cout)

    M, K = patches.shape
    N = Cout

    # Tile choice: lane-dense N tiles (multiple of 128, capped at 512),
    # M tiles multiple of 8 (capped at 256), K kept whole (it is the conv
    # receptive field, typically small).  Worst-case per-block VMEM with
    # double buffering stays in the low-MiB range -> fits v7x's 32 MiB scoped
    # VMEM as well as v5e/v6e.
    TM_MAX, TN_MAX = 256, 512
    if M <= TM_MAX:
        tm = _round_up(M, 8)
        M_pad = tm
    else:
        tm = TM_MAX
        M_pad = _round_up(M, tm)
    if N <= TN_MAX:
        tn = _round_up(N, 128)
        N_pad = tn
    else:
        tn = TN_MAX
        N_pad = _round_up(N, tn)

    if M_pad != M:
        patches = jnp.pad(patches, ((0, M_pad - M), (0, 0)))
    if N_pad != N:
        w2 = jnp.pad(w2, ((0, 0), (0, N_pad - N)))
        bias = jnp.pad(bias, (0, N_pad - N))
    bias2d = bias.reshape(1, N_pad)

    grid = (M_pad // tm, N_pad // tn)

    out = pl.pallas_call(
        _patch_matmul_kernel,
        out_shape=jax.ShapeDtypeStruct((M_pad, N_pad), x.dtype),
        grid=grid,
        in_specs=[
            pl.BlockSpec((tm, K), lambda i, j: (i, 0)),   # patch rows
            pl.BlockSpec((K, tn), lambda i, j: (0, j)),   # weight columns
            pl.BlockSpec((1, tn), lambda i, j: (0, j)),   # bias slice
        ],
        out_specs=pl.BlockSpec((tm, tn), lambda i, j: (i, j)),
        compiler_params=pltpu.CompilerParams(
            dimension_semantics=("parallel", "parallel"),
            vmem_limit_bytes=32 * 1024 * 1024,
        ),
    )(patches, w2, bias2d)

    return out[:M, :N].reshape(B, Ho, Wo, Cout)


if __name__ == "__main__":
    key = jax.random.PRNGKey(0)
    B, H, W = 2, 16, 16
    Cin, Cout, P = 4, 128, 4

    k_x, k_w, k_b = jax.random.split(key, 3)
    x = jax.random.normal(k_x, (B, H, W, Cin), dtype=jnp.float32)

    # nn.Conv2d default init: U(-1/sqrt(fan_in), 1/sqrt(fan_in)), fan_in = Cin*P*P.
    fan_in = Cin * P * P
    bound = 1.0 / math.sqrt(fan_in)
    weight = jax.random.uniform(k_w, (Cout, Cin, P, P), jnp.float32, -bound, bound)
    bias = jax.random.uniform(k_b, (Cout,), jnp.float32, -bound, bound)

    y = downsample2d_forward(x, weight, bias, P)
    y = jax.block_until_ready(y)

    assert y.shape == (B, H // P, W // P, Cout), y.shape

    # Reference: XLA conv with identical semantics (NHWC x HWIO, stride=P).
    ref = jax.lax.conv_general_dilated(
        x,
        weight.transpose(2, 3, 1, 0),  # (P, P, Cin, Cout) = HWIO
        window_strides=(P, P),
        padding="VALID",
        dimension_numbers=("NHWC", "HWIO", "NHWC"),
    ) + bias
    assert jnp.allclose(y, ref, atol=1e-4, rtol=1e-4), "Downsample2D mismatch"

    print("KERNEL_OK")
</pallas_src>

<mosaic_0001>
module attributes {stable_mosaic.version = 11 : i64} {
  func.func @_patch_matmul_kernel(%arg0: i32, %arg1: i32, %arg2: memref<32x64xf32, #tpu.memory_space<vmem>>, %arg3: memref<64x128xf32, #tpu.memory_space<vmem>>, %arg4: memref<1x128xf32, #tpu.memory_space<vmem>>, %arg5: memref<32x128xf32, #tpu.memory_space<vmem>>) attributes {dimension_semantics = [#tpu.dimension_semantics<parallel>, #tpu.dimension_semantics<parallel>], iteration_bounds = array<i64: 1, 1>, scalar_prefetch = 0 : i64, scratch_operands = 0 : i64, tpu.core_type = #tpu.core_type<tc>, window_params = [{transform_indices = @transform_0, window_bounds = array<i64: 32, 64>}, {transform_indices = @transform_1, window_bounds = array<i64: 64, 128>}, {transform_indices = @transform_2, window_bounds = array<i64: 1, 128>}, {transform_indices = @transform_3, window_bounds = array<i64: 32, 128>}]} {
    %c0 = arith.constant 0 : index
    %c0_0 = arith.constant 0 : index
    %0 = vector.load %arg2[%c0, %c0_0] : memref<32x64xf32, #tpu.memory_space<vmem>>, vector<32x64xf32>
    %c0_1 = arith.constant 0 : index
    %c0_2 = arith.constant 0 : index
    %1 = vector.load %arg3[%c0_1, %c0_2] : memref<64x128xf32, #tpu.memory_space<vmem>>, vector<64x128xf32>
    %cst = arith.constant dense<0.000000e+00> : vector<32x128xf32>
    %2 = tpu.matmul %0, %1, %cst {dimension_numbers = #tpu.dot_dimension_numbers<[1], [0], [0], [1], [0, 0, 1, 1], [], []>} : vector<32x64xf32>, vector<64x128xf32>, vector<32x128xf32> -> vector<32x128xf32>
    %c0_3 = arith.constant 0 : index
    %c0_4 = arith.constant 0 : index
    %3 = vector.load %arg4[%c0_3, %c0_4] : memref<1x128xf32, #tpu.memory_space<vmem>>, vector<1x128xf32>
    %4 = vector.broadcast %3 : vector<1x128xf32> to vector<32x128xf32>
    %5 = arith.addf %2, %4 : vector<32x128xf32>
    %c0_5 = arith.constant 0 : index
    %c0_6 = arith.constant 0 : index
    %6 = vector.load %arg5[%c0_5, %c0_6] : memref<32x128xf32, #tpu.memory_space<vmem>>, vector<32x128xf32>
    tpu.vector_store %arg5[%c0_5, %c0_6], %5 {strides = array<i32>} : memref<32x128xf32, #tpu.memory_space<vmem>>, vector<32x128xf32>,
    return
  }
  func.func @transform_0(%arg0: i32, %arg1: i32) -> (i32, i32) {
    %c0_i32 = arith.constant 0 : i32
    %c0_i32_0 = arith.constant 0 : i32
    return %arg0, %c0_i32 : i32, i32
  }
  func.func @transform_1(%arg0: i32, %arg1: i32) -> (i32, i32) {
    %c0_i32 = arith.constant 0 : i32
    %c0_i32_0 = arith.constant 0 : i32
    return %c0_i32, %arg1 : i32, i32
  }
  func.func @transform_2(%arg0: i32, %arg1: i32) -> (i32, i32) {
    %c0_i32 = arith.constant 0 : i32
    %c0_i32_0 = arith.constant 0 : i32
    return %c0_i32, %arg1 : i32, i32
  }
  func.func @transform_3(%arg0: i32, %arg1: i32) -> (i32, i32) {
    %c0_i32 = arith.constant 0 : i32
    return %arg0, %arg1 : i32, i32
  }
}

</mosaic_0001>

<llo_original>
// kernel: tpu_custom_call.1
$region0: #{tpu_custom_call.1}
  #allocation0 [shape = 'u32[]', space=smem, size = 0x4, offset = 0x4, fixed_abs, tag = 'smem constant byte address 0x4 - core index']
  #allocation1 [shape = 'u32[72,128]{1,0:T(1,128)}', space=vmem, size = 0x9000, scoped, tag = 'internal scratch']
  %s0 = inlined_call_operand.hbm [shape: f32[32,64], index: 0, kind: input, shape index: {}]
  %s1 = inlined_call_operand.hbm [shape: f32[64,128], index: 1, kind: input, shape index: {}]
  %s2 = inlined_call_operand.vmem [shape: f32[1,128], index: 2, kind: input, shape index: {}]
  %s3 = inlined_call_operand.hbm [shape: f32[32,128], index: 3, kind: output, shape index: {}]
  %s4 = sld [smem:[#allocation0]]
  $region30: #{tpu_custom_call.1} parent=0
    _
  %s6 = ssub.s32 1, %s4
  %s7 = scalar_select 0, %s6, %s4
  $region1: #{tpu_custom_call.1} parent=0
    #allocation2 [shape = 'u8[16384]{0}', space=vmem, size = 0x4000, scoped, tag = 'input window, operand 0, single buffered']
    #allocation3 [shape = 's32[1]{0}', space=sflag, size = 0x4, scoped, tag = 'scoped memory for tpu_custom_call.1']
    #allocation4 [shape = 's32[1]{0}', space=sflag, size = 0x4, scoped, tag = 'scoped memory for tpu_custom_call.1']
    #allocation5 [shape = 'u8[32768]{0}', space=vmem, size = 0x8000, scoped, tag = 'input window, operand 1, single buffered']
    #allocation6 [shape = 's32[1]{0}', space=sflag, size = 0x4, scoped, tag = 'scoped memory for tpu_custom_call.1']
    #allocation7 [shape = 'u8[16384]{0}', space=vmem, size = 0x4000, scoped, tag = 'output window, operand 0, single buffered']
    %8 = vsyncpa [#allocation3], 0
    %9 = vsyncpa [#allocation6], 0
    %10 = vsyncpa [#allocation4], 0
    // Predicated region
    $region2: #{tpu_custom_call.1} parent=1 // pred_check
      _
    $region3: #{tpu_custom_call.1} parent=1 // pred_check_branch
      %12 = sbr.rel (0) target = $region5
    $region4: #{tpu_custom_call.1} parent=1 // pred_region
      %14 = vsyncadd [#allocation3], 0
      %s15 = sshll.u32 %s0, 4
      %s16 = int_to_ptr.hbm [resolvable:$true] %s15
      %s17 = sshll.u32 [#allocation2], 4
      %s18 = int_to_ptr.vmem [resolvable:$true] %s17
      %23 = dma.hbm_to_vmem [thread:$0]  %s16, 512, %s18, [#allocation3], 128, 128, 8
    $region5: #{tpu_custom_call.1} parent=1 // pred_fallthru
      _
    // Predicated region
    $region6: #{tpu_custom_call.1} parent=1 // pred_check
      _
    $region7: #{tpu_custom_call.1} parent=1 // pred_check_branch
      %25 = sbr.rel (0) target = $region9
    $region8: #{tpu_custom_call.1} parent=1 // pred_region
      %27 = vsyncadd [#allocation6], 0
      %s28 = sshll.u32 %s1, 4
      %s29 = int_to_ptr.hbm [resolvable:$true] %s28
      %s30 = sshll.u32 [#allocation5], 4
      %s31 = int_to_ptr.vmem [resolvable:$true] %s30
      %36 = dma.hbm_to_vmem [thread:$0]  %s29, 1024, %s31, [#allocation6], 128, 128, 8
    $region9: #{tpu_custom_call.1} parent=1 // pred_fallthru
      _
    // Predicated region
    $region10: #{tpu_custom_call.1} parent=1 // pred_check
      _
    $region11: #{tpu_custom_call.1} parent=1 // pred_check_branch
      %38 = sbr.rel (0) target = $region13
    $region12: #{tpu_custom_call.1} parent=1 // pred_region
      _
    $region13: #{tpu_custom_call.1} parent=1 // pred_fallthru
      _
    // Predicated region
    $region14: #{tpu_custom_call.1} parent=1 // pred_check
      _
    $region15: #{tpu_custom_call.1} parent=1 // pred_check_branch
      %40 = sbr.rel (0) target = $region17
    $region16: #{tpu_custom_call.1} parent=1 // pred_region
      %42 = dma.done [#allocation3], 512
    $region17: #{tpu_custom_call.1} parent=1 // pred_fallthru
      _
    // Predicated region
    $region18: #{tpu_custom_call.1} parent=1 // pred_check
      _
    $region19: #{tpu_custom_call.1} parent=1 // pred_check_branch
      %44 = sbr.rel (0) target = $region21
    $region20: #{tpu_custom_call.1} parent=1 // pred_region
      %46 = dma.done [#allocation6], 1024
    $region21: #{tpu_custom_call.1} parent=1 // pred_fallthru
      _
    %v47 = vld [vmem:[#allocation2] sm:$0xff]
    %v48 = vld [vmem:[#allocation2 + $0x8] sm:$0xff]
    %v49 = vld [vmem:[#allocation2 + $0x10] sm:$0xff]
    %v50 = vld [vmem:[#allocation2 + $0x18] sm:$0xff]
    %v51 = vld [vmem:[#allocation5] sm:$0xff]
    %v52 = vld [vmem:[#allocation5 + $0x8] sm:$0xff]
    %v53 = vld [vmem:[#allocation5 + $0x10] sm:$0xff]
    %v54 = vld [vmem:[#allocation5 + $0x18] sm:$0xff]
    %v55 = vld [vmem:[#allocation5 + $0x20] sm:$0xff]
    %v56 = vld [vmem:[#allocation5 + $0x28] sm:$0xff]
    %v57 = vld [vmem:[#allocation5 + $0x30] sm:$0xff]
    %v58 = vld [vmem:[#allocation5 + $0x38] sm:$0xff]
    %v59 = vld [vmem:[%s2] sm:$0x1]
    %v61 = vperm.slane %v59, 0
    %vm63 = vcmask 523264
    %v65 = vsel %vm63, %v47, 0
    %v68 = vsel %vm63, %v48, 0
    %v71 = vsel %vm63, %v49, 0
    %v74 = vsel %vm63, %v50, 0
    %76 = vmatpush.msra.mxu0 0.0
    %77 = vmatpush.msra.mxu0 0.0
    %78 = vmatpush.msra.mxu0 0.0
    %79 = vmatpush.msra.mxu0 0.0
    %80 = vmatpush.msra.mxu0 0.0
    %81 = vmatpush.msra.mxu0 0.0
    %82 = vmatpush.msra.mxu0 0.0
    %83 = vmatpush.msra.mxu0 0.0
    %84 = vmatpush.msra.mxu0 %v58
    %85 = vmatpush.msra.mxu0 %v57
    %86 = vmatpush.msra.mxu0 %v56
    %87 = vmatpush.msra.mxu0 %v55
    %88 = vmatpush.msra.mxu0 %v54
    %89 = vmatpush.msra.mxu0 %v53
    %90 = vmatpush.msra.mxu0 %v52
    %91 = vmatpush.msra.mxu0 %v51
    %92 = vmatmul.f32.gmra.mxu0 %v65
    %v93 = vpop.f32.mrf.mxu0
    %v94 = vadd.f32 %v61, %v93
    %95 = vmatmul.f32.gmra.mxu0 %v68
    %v96 = vpop.f32.mrf.mxu0
    %v97 = vadd.f32 %v61, %v96
    %98 = vmatmul.f32.gmra.mxu0 %v71
    %v99 = vpop.f32.mrf.mxu0
    %v100 = vadd.f32 %v61, %v99
    %101 = vmatmul.f32.gmra.mxu0 %v74
    %v102 = vpop.f32.mrf.mxu0
    %v103 = vadd.f32 %v61, %v102
    %104 = vdwg.mxu0
    %105 = vst [vmem:[#allocation7] sm:$0xff] %v94
    %106 = vst [vmem:[#allocation7 + $0x8] sm:$0xff] %v97
    %107 = vst [vmem:[#allocation7 + $0x10] sm:$0xff] %v100
    %108 = vst [vmem:[#allocation7 + $0x18] sm:$0xff] %v103
    // Predicated region
    $region22: #{tpu_custom_call.1} parent=1 // pred_check
      _
    $region23: #{tpu_custom_call.1} parent=1 // pred_check_branch
      %110 = sbr.rel (0) target = $region25
    $region24: #{tpu_custom_call.1} parent=1 // pred_region
      %112 = vsyncadd [#allocation4], 0
      %s113 = sshll.u32 [#allocation7], 4
      %s114 = int_to_ptr.vmem [resolvable:$true] %s113
      %s115 = sshll.u32 %s3, 4
      %s116 = int_to_ptr.hbm [resolvable:$true] %s115
      %121 = dma.vmem_to_hbm [thread:$0]  %s114, 512, %s116, [#allocation4], 128, 128, 8
    $region25: #{tpu_custom_call.1} parent=1 // pred_fallthru
      _
    // Predicated region
    $region26: #{tpu_custom_call.1} parent=1 // pred_check
      _
    $region27: #{tpu_custom_call.1} parent=1 // pred_check_branch
      %123 = sbr.rel (0) target = $region29
    $region28: #{tpu_custom_call.1} parent=1 // pred_region
      %125 = dma.done [#allocation4], 512
    $region29: #{tpu_custom_call.1} parent=1 // pred_fallthru
      _
    %126 = vsyncpa [#allocation3], 1
    %127 = vsyncpa [#allocation6], 1
    %128 = vsyncpa [#allocation4], 1

</llo_original>
